<compile_context>
chip_gen: v7x
topology: tpu7x:2x2x1
jax: 0.10.0
libtpu: 0.0.40
codegen_flags: <defaults>
</compile_context>

<pallas_src>
import math

import jax
import jax.numpy as jnp
from jax.experimental import pallas as pl
from jax.experimental.pallas import tpu as pltpu


def _round_up(x, m):
    return ((x + m - 1) // m) * m


# --------------------------------------------------------------------------- #
# Kernel
# --------------------------------------------------------------------------- #
def mlp_kernel(x_ref, w1_ref, b1_ref, w2_ref, b2_ref, o_ref, acc_ref):
    """Fused y = sigmoid(sigmoid(x @ W1 + b1) @ W2 + b2).

    Grid = (batch_tiles, h_tiles). The H axis ("arbitrary", innermost) streams
    slices of the hidden dimension: each step computes the *complete* hidden
    activation for its slice of hidden units (the I contraction is not tiled)
    and accumulates its output contribution into an f32 scratch buffer.
    """
    hk = pl.program_id(1)

    @pl.when(hk == 0)
    def _init():
        acc_ref[...] = jnp.zeros_like(acc_ref)

    # Cast activations to bf16 in-kernel (x stays f32 in HBM -> half the traffic).
    x = x_ref[...].astype(jnp.bfloat16)
    h = jnp.dot(x, w1_ref[...], preferred_element_type=jnp.float32)
    h = h + b1_ref[...]
    # sigmoid(z) == 0.5 * tanh(0.5 * z) + 0.5   (single EUP transcendental)
    h = 0.5 * jnp.tanh(0.5 * h) + 0.5
    acc_ref[...] += jnp.dot(h.astype(jnp.bfloat16), w2_ref[...],
                            preferred_element_type=jnp.float32)

    @pl.when(hk == pl.num_programs(1) - 1)
    def _finalize():
        y = acc_ref[...] + b2_ref[...]
        o_ref[...] = (0.5 * jnp.tanh(0.5 * y) + 0.5).astype(o_ref.dtype)


# --------------------------------------------------------------------------- #
# Tiling / VMEM heuristics
# --------------------------------------------------------------------------- #
def _physical_vmem_bytes():
    try:
        return int(pltpu.get_tpu_info().vmem_capacity_bytes)
    except Exception:
        return 64 << 20        # v7x-sized fallback; safe on every generation


def _choose_h_tiling(I, H, O, vmem_cap):
    """Keep W1/W2 resident (single-buffered bf16) when they fit ~40% of VMEM;
    otherwise stream the hidden dim in multiple-of-128 tiles."""
    bf16 = 2
    Ir, Hr, Or = _round_up(I, 128), _round_up(H, 128), _round_up(O, 128)
    budget = int(vmem_cap * 0.40)
    if (Ir * Hr + Hr * Or) * bf16 <= budget:
        return H, 1                         # full-extent H block, no padding
    per_h = 2 * (Ir + Or) * bf16            # double-buffered streamed slabs
    th = max(128, (budget // per_h) // 128 * 128)
    th = min(th, Hr)
    n_h = -(-H // th)
    return th, n_h


def _choose_batch_tiling(B, block_b=512):
    """Small batch -> one full-extent tile (zero padding). Large batch -> >=2
    tiles (multiple of 8) with minimal batch padding, so the "parallel" axis can
    shard across v7x's two TensorCores and DMA overlaps compute."""
    if B <= 256:
        return B, B
    cap = max(128, min(_round_up(block_b, 8), 2048))
    max_tm = min(cap, _round_up(-(-B // 2), 8))     # guarantee >= 2 grid steps
    best_tm = max_tm
    best_waste = _round_up(B, max_tm) - B
    tm = max_tm - 8
    while tm >= 128 and best_waste > 0:
        waste = _round_up(B, tm) - B
        if waste < best_waste:
            best_tm, best_waste = tm, waste
        tm -= 8
    return best_tm, _round_up(B, best_tm)


def _vmem_limit_bytes(TM, I, TH, n_h, O, vmem_cap):
    f32, bf16 = 4, 2
    TMr = _round_up(TM, 8)
    Ir, THr, Or = _round_up(I, 128), _round_up(TH, 128), _round_up(O, 128)
    wbuf = 1 if n_h == 1 else 2            # resident weights are single-buffered
    need = (
        2 * TMr * Ir * f32                 # x tiles (f32, double-buffered)
        + 2 * TMr * Or * f32               # output tiles (double-buffered)
        + wbuf * Ir * THr * bf16           # W1 block(s)
        + wbuf * THr * Or * bf16           # W2 block(s)
        + wbuf * 8 * THr * f32             # b1 block(s) (sublane padded)
        + 8 * Or * f32                     # b2
        + TMr * Or * f32                   # f32 accumulator scratch
        + 3 * TMr * THr * f32              # hidden-activation working set
    )
    need = int(need * 1.2) + (2 << 20)     # modest headroom for compiler scratch
    return int(min(max(need, 8 << 20), int(vmem_cap * 0.85)))


# --------------------------------------------------------------------------- #
# Wrapper
# --------------------------------------------------------------------------- #
def prepare_mlp_params(w1, b1, w2, b2):
    """One-time weight prep (hoisted out of the per-call path): decide hidden-dim
    streaming, zero-pad H only if streamed, cast weights to bf16, biases to f32."""
    I, H = w1.shape
    O = w2.shape[1]
    b1 = jnp.asarray(b1).reshape(1, H)
    b2 = jnp.asarray(b2).reshape(1, O)
    vmem_cap = _physical_vmem_bytes()
    TH, n_h = _choose_h_tiling(I, H, O, vmem_cap)
    Hp = TH * n_h
    if Hp != H:
        # Padding is transparent: padded W1 cols / b1 entries are zero, so the
        # padded hidden units are sigmoid(0)=0.5 times zero W2 rows -> contribute 0.
        w1 = jnp.pad(w1, ((0, 0), (0, Hp - H)))
        b1 = jnp.pad(b1, ((0, 0), (0, Hp - H)))
        w2 = jnp.pad(w2, ((0, Hp - H), (0, 0)))
    params = (jnp.asarray(w1, jnp.bfloat16), jnp.asarray(b1, jnp.float32),
              jnp.asarray(w2, jnp.bfloat16), jnp.asarray(b2, jnp.float32))
    meta = {"I": I, "H": H, "O": O, "TH": TH, "n_h": n_h, "vmem_cap": vmem_cap}
    return params, meta


def mlp_forward(x, params, meta, *, block_b=512):
    """y = sigmoid(sigmoid(x @ W1 + b1) @ W2 + b2), fused in one Pallas kernel."""
    B, I = x.shape
    assert I == meta["I"], "input feature size mismatch"
    O, TH, n_h = meta["O"], meta["TH"], meta["n_h"]
    w1p, b1p, w2p, b2p = params

    TM, Bp = _choose_batch_tiling(B, block_b)
    xp = x.astype(jnp.float32)
    if Bp != B:
        xp = jnp.pad(xp, ((0, Bp - B), (0, 0)))
    n_b = Bp // TM

    resident = (n_h == 1)

    def weight_spec(shape, index_map):
        if resident:   # constant block index -> one DMA; a 2nd buffer is pure waste
            return pl.BlockSpec(shape, index_map, pipeline_mode=pl.Buffered(1))
        return pl.BlockSpec(shape, index_map)

    out = pl.pallas_call(
        mlp_kernel,
        out_shape=jax.ShapeDtypeStruct((Bp, O), jnp.float32),
        grid_spec=pltpu.PrefetchScalarGridSpec(
            num_scalar_prefetch=0,
            grid=(n_b, n_h),
            in_specs=[
                pl.BlockSpec((TM, I), lambda i, k: (i, 0)),          # x (f32)
                weight_spec((I, TH), lambda i, k: (0, k)),           # W1 (bf16)
                weight_spec((1, TH), lambda i, k: (0, k)),           # b1 (f32)
                weight_spec((TH, O), lambda i, k: (k, 0)),           # W2 (bf16)
                pl.BlockSpec((1, O), lambda i, k: (0, 0),            # b2 (f32)
                             pipeline_mode=pl.Buffered(1)),
            ],
            out_specs=pl.BlockSpec((TM, O), lambda i, k: (i, 0)),
            scratch_shapes=[pltpu.VMEM((TM, O), jnp.float32)],
        ),
        compiler_params=pltpu.CompilerParams(
            dimension_semantics=("parallel", "arbitrary"),
            vmem_limit_bytes=_vmem_limit_bytes(TM, I, TH, n_h, O,
                                               meta["vmem_cap"]),
        ),
    )(xp, w1p, b1p, w2p, b2p)

    return out if Bp == B else out[:B]


def init_linear_params(key, in_features, out_features):
    # Mirrors torch.nn.Linear default init: U(-1/sqrt(fan_in), 1/sqrt(fan_in)).
    kw, kb = jax.random.split(key)
    bound = 1.0 / math.sqrt(in_features)
    # Stored as (in, out) == transpose of PyTorch's (out, in) weight.
    w = jax.random.uniform(kw, (in_features, out_features), jnp.float32,
                           minval=-bound, maxval=bound)
    b = jax.random.uniform(kb, (1, out_features), jnp.float32,
                           minval=-bound, maxval=bound)
    return w, b


if __name__ == "__main__":
    key = jax.random.PRNGKey(0)
    k_x, k_l1, k_l2 = jax.random.split(key, 3)

    batch = 8
    input_size = 16
    hidden_size = 32
    output_size = 8

    x = jax.random.normal(k_x, (batch, input_size), jnp.float32)
    w1, b1 = init_linear_params(k_l1, input_size, hidden_size)
    w2, b2 = init_linear_params(k_l2, hidden_size, output_size)

    params, meta = prepare_mlp_params(w1, b1, w2, b2)   # one-time weight prep
    out = mlp_forward(x, params, meta)
    out = jax.block_until_ready(out)

    # Reference check in plain JAX f32 (same math as the PyTorch forward).
    ref = jax.nn.sigmoid(jax.nn.sigmoid(x @ w1 + b1) @ w2 + b2)
    assert out.shape == (batch, output_size)
    # bf16 MXU inputs -> loosened tolerance; sigmoid squashes the error further.
    err = float(jnp.max(jnp.abs(out - ref)))
    assert jnp.allclose(out, ref, atol=2e-2, rtol=0.0), err

    print("KERNEL_OK")
</pallas_src>

<mosaic_0001>
module attributes {stable_mosaic.version = 11 : i64} {
  func.func @mlp_kernel(%arg0: i32, %arg1: i32, %arg2: memref<8x16xf32, #tpu.memory_space<vmem>>, %arg3: memref<16x32xbf16, #tpu.memory_space<vmem>>, %arg4: memref<1x32xf32, #tpu.memory_space<vmem>>, %arg5: memref<32x8xbf16, #tpu.memory_space<vmem>>, %arg6: memref<1x8xf32, #tpu.memory_space<vmem>>, %arg7: memref<8x8xf32, #tpu.memory_space<vmem>>, %arg8: memref<8x8xf32, #tpu.memory_space<vmem>>) attributes {dimension_semantics = [#tpu.dimension_semantics<parallel>, #tpu.dimension_semantics<arbitrary>], iteration_bounds = array<i64: 1, 1>, scalar_prefetch = 0 : i64, scratch_operands = 1 : i64, tpu.core_type = #tpu.core_type<tc>, window_params = [{transform_indices = @transform_0, window_bounds = array<i64: 8, 16>}, {pipeline_mode = #tpu.pipeline_mode<synchronous>, transform_indices = @transform_1, window_bounds = array<i64: 16, 32>}, {pipeline_mode = #tpu.pipeline_mode<synchronous>, transform_indices = @transform_2, window_bounds = array<i64: 1, 32>}, {pipeline_mode = #tpu.pipeline_mode<synchronous>, transform_indices = @transform_3, window_bounds = array<i64: 32, 8>}, {pipeline_mode = #tpu.pipeline_mode<synchronous>, transform_indices = @transform_4, window_bounds = array<i64: 1, 8>}, {transform_indices = @transform_5, window_bounds = array<i64: 8, 8>}]} {
    %c0_i32 = arith.constant 0 : i32
    %0 = arith.cmpi eq, %arg1, %c0_i32 : i32
    %1 = arith.extui %0 : i1 to i32
    %c0_i32_0 = arith.constant 0 : i32
    %2 = arith.cmpi ne, %1, %c0_i32_0 : i32
    scf.if %2 {
      %cst_18 = arith.constant 0.000000e+00 : f32
      %26 = vector.broadcast %cst_18 : f32 to vector<8x8xf32>
      %c0_19 = arith.constant 0 : index
      %c0_20 = arith.constant 0 : index
      %27 = vector.load %arg8[%c0_19, %c0_20] : memref<8x8xf32, #tpu.memory_space<vmem>>, vector<8x8xf32>
      tpu.vector_store %arg8[%c0_19, %c0_20], %26 {strides = array<i32>} : memref<8x8xf32, #tpu.memory_space<vmem>>, vector<8x8xf32>,
    } else {
    }
    %c0 = arith.constant 0 : index
    %c0_1 = arith.constant 0 : index
    %3 = vector.load %arg2[%c0, %c0_1] : memref<8x16xf32, #tpu.memory_space<vmem>>, vector<8x16xf32>
    %4 = arith.truncf %3 : vector<8x16xf32> to vector<8x16xbf16>
    %c0_2 = arith.constant 0 : index
    %c0_3 = arith.constant 0 : index
    %5 = vector.load %arg3[%c0_2, %c0_3] : memref<16x32xbf16, #tpu.memory_space<vmem>>, vector<16x32xbf16>
    %cst = arith.constant dense<0.000000e+00> : vector<8x32xf32>
    %6 = tpu.matmul %4, %5, %cst {dimension_numbers = #tpu.dot_dimension_numbers<[1], [0], [0], [1], [0, 0, 1, 1], [], []>} : vector<8x16xbf16>, vector<16x32xbf16>, vector<8x32xf32> -> vector<8x32xf32>
    %c0_4 = arith.constant 0 : index
    %c0_5 = arith.constant 0 : index
    %7 = vector.load %arg4[%c0_4, %c0_5] : memref<1x32xf32, #tpu.memory_space<vmem>>, vector<1x32xf32>
    %8 = vector.broadcast %7 : vector<1x32xf32> to vector<8x32xf32>
    %9 = arith.addf %6, %8 : vector<8x32xf32>
    %cst_6 = arith.constant 5.000000e-01 : f32
    %10 = vector.broadcast %cst_6 : f32 to vector<8x32xf32>
    %11 = arith.mulf %10, %9 : vector<8x32xf32>
    %12 = math.tanh %11 : vector<8x32xf32>
    %cst_7 = arith.constant 5.000000e-01 : f32
    %13 = vector.broadcast %cst_7 : f32 to vector<8x32xf32>
    %14 = arith.mulf %13, %12 : vector<8x32xf32>
    %cst_8 = arith.constant 5.000000e-01 : f32
    %15 = vector.broadcast %cst_8 : f32 to vector<8x32xf32>
    %16 = arith.addf %14, %15 : vector<8x32xf32>
    %c0_9 = arith.constant 0 : index
    %c0_10 = arith.constant 0 : index
    %17 = vector.load %arg8[%c0_9, %c0_10] : memref<8x8xf32, #tpu.memory_space<vmem>>, vector<8x8xf32>
    %18 = arith.truncf %16 : vector<8x32xf32> to vector<8x32xbf16>
    %c0_11 = arith.constant 0 : index
    %c0_12 = arith.constant 0 : index
    %19 = vector.load %arg5[%c0_11, %c0_12] : memref<32x8xbf16, #tpu.memory_space<vmem>>, vector<32x8xbf16>
    %cst_13 = arith.constant dense<0.000000e+00> : vector<8x8xf32>
    %20 = tpu.matmul %18, %19, %cst_13 {dimension_numbers = #tpu.dot_dimension_numbers<[1], [0], [0], [1], [0, 0, 1, 1], [], []>} : vector<8x32xbf16>, vector<32x8xbf16>, vector<8x8xf32> -> vector<8x8xf32>
    %21 = arith.addf %17, %20 : vector<8x8xf32>
    %c0_14 = arith.constant 0 : index
    %c0_15 = arith.constant 0 : index
    %22 = vector.load %arg8[%c0_14, %c0_15] : memref<8x8xf32, #tpu.memory_space<vmem>>, vector<8x8xf32>
    tpu.vector_store %arg8[%c0_14, %c0_15], %21 {strides = array<i32>} : memref<8x8xf32, #tpu.memory_space<vmem>>, vector<8x8xf32>,
    %c0_i32_16 = arith.constant 0 : i32
    %23 = arith.cmpi eq, %arg1, %c0_i32_16 : i32
    %24 = arith.extui %23 : i1 to i32
    %c0_i32_17 = arith.constant 0 : i32
    %25 = arith.cmpi ne, %24, %c0_i32_17 : i32
    scf.if %25 {
      %c0_18 = arith.constant 0 : index
      %c0_19 = arith.constant 0 : index
      %26 = vector.load %arg8[%c0_18, %c0_19] : memref<8x8xf32, #tpu.memory_space<vmem>>, vector<8x8xf32>
      %c0_20 = arith.constant 0 : index
      %c0_21 = arith.constant 0 : index
      %27 = vector.load %arg6[%c0_20, %c0_21] : memref<1x8xf32, #tpu.memory_space<vmem>>, vector<1x8xf32>
      %28 = vector.broadcast %27 : vector<1x8xf32> to vector<8x8xf32>
      %29 = arith.addf %26, %28 : vector<8x8xf32>
      %cst_22 = arith.constant 5.000000e-01 : f32
      %30 = vector.broadcast %cst_22 : f32 to vector<8x8xf32>
      %31 = arith.mulf %30, %29 : vector<8x8xf32>
      %32 = math.tanh %31 : vector<8x8xf32>
      %cst_23 = arith.constant 5.000000e-01 : f32
      %33 = vector.broadcast %cst_23 : f32 to vector<8x8xf32>
      %34 = arith.mulf %33, %32 : vector<8x8xf32>
      %cst_24 = arith.constant 5.000000e-01 : f32
      %35 = vector.broadcast %cst_24 : f32 to vector<8x8xf32>
      %36 = arith.addf %34, %35 : vector<8x8xf32>
      %c0_25 = arith.constant 0 : index
      %c0_26 = arith.constant 0 : index
      %37 = vector.load %arg7[%c0_25, %c0_26] : memref<8x8xf32, #tpu.memory_space<vmem>>, vector<8x8xf32>
      tpu.vector_store %arg7[%c0_25, %c0_26], %36 {strides = array<i32>} : memref<8x8xf32, #tpu.memory_space<vmem>>, vector<8x8xf32>,
    } else {
    }
    return
  }
  func.func @transform_0(%arg0: i32, %arg1: i32) -> (i32, i32) {
    %c0_i32 = arith.constant 0 : i32
    %c0_i32_0 = arith.constant 0 : i32
    return %arg0, %c0_i32 : i32, i32
  }
  func.func @transform_1(%arg0: i32, %arg1: i32) -> (i32, i32) {
    %c0_i32 = arith.constant 0 : i32
    %c0_i32_0 = arith.constant 0 : i32
    return %c0_i32, %arg1 : i32, i32
  }
  func.func @transform_2(%arg0: i32, %arg1: i32) -> (i32, i32) {
    %c0_i32 = arith.constant 0 : i32
    %c0_i32_0 = arith.constant 0 : i32
    return %c0_i32, %arg1 : i32, i32
  }
  func.func @transform_3(%arg0: i32, %arg1: i32) -> (i32, i32) {
    %c0_i32 = arith.constant 0 : i32
    %c0_i32_0 = arith.constant 0 : i32
    return %arg1, %c0_i32 : i32, i32
  }
  func.func @transform_4(%arg0: i32, %arg1: i32) -> (i32, i32) {
    %c0_i32 = arith.constant 0 : i32
    %c0_i32_0 = arith.constant 0 : i32
    %c0_i32_1 = arith.constant 0 : i32
    return %c0_i32, %c0_i32_0 : i32, i32
  }
  func.func @transform_5(%arg0: i32, %arg1: i32) -> (i32, i32) {
    %c0_i32 = arith.constant 0 : i32
    %c0_i32_0 = arith.constant 0 : i32
    return %arg0, %c0_i32 : i32, i32
  }
}

</mosaic_0001>

<llo_original>
// kernel: tpu_custom_call.1
$region0: #{tpu_custom_call.1}
  #allocation0 [shape = 'u32[]', space=smem, size = 0x4, offset = 0x4, fixed_abs, tag = 'smem constant byte address 0x4 - core index']
  #allocation1 [shape = 'u32[144,128]{1,0:T(1,128)}', space=vmem, size = 0x12000, scoped, tag = 'internal scratch']
  #allocation2 [shape = 'f32[8,8]{1,0:T(8,128)}', space=vmem, size = 0x1000, scoped, tag = 'scratch operand']
  %s0 = inlined_call_operand.vmem [shape: f32[8,16], index: 0, kind: input, shape index: {}]
  %s1 = inlined_call_operand.vmem [shape: bf16[16,32], index: 1, kind: input, shape index: {}]
  %s2 = inlined_call_operand.vmem [shape: f32[1,32], index: 2, kind: input, shape index: {}]
  %s3 = inlined_call_operand.vmem [shape: bf16[32,8], index: 3, kind: input, shape index: {}]
  %s4 = inlined_call_operand.vmem [shape: f32[1,8], index: 4, kind: input, shape index: {}]
  %s5 = inlined_call_operand.hbm [shape: f32[8,8], index: 5, kind: output, shape index: {}]
  %s6 = sld [smem:[#allocation0]]
  $region38: #{tpu_custom_call.1} parent=0
    _
  %s8 = ssub.s32 1, %s6
  %s9 = scalar_select 0, %s8, %s6
  $region1: #{tpu_custom_call.1} parent=0
    #allocation3 [shape = 'u8[4096]{0}', space=vmem, size = 0x1000, scoped, tag = 'output window, operand 0, single buffered']
    #allocation4 [shape = 's32[1]{0}', space=sflag, size = 0x4, scoped, tag = 'scoped memory for tpu_custom_call.1']
    %10 = vsyncpa [#allocation4], 0
    // Predicated region
    $region2: #{tpu_custom_call.1} parent=1 // pred_check
      _
    $region3: #{tpu_custom_call.1} parent=1 // pred_check_branch
      %12 = sbr.rel (0) target = $region5
    $region4: #{tpu_custom_call.1} parent=1 // pred_region
      _
    $region5: #{tpu_custom_call.1} parent=1 // pred_fallthru
      _
    // Predicated region
    $region6: #{tpu_custom_call.1} parent=1 // pred_check
      _
    $region7: #{tpu_custom_call.1} parent=1 // pred_check_branch
      %14 = sbr.rel (0) target = $region9
    $region8: #{tpu_custom_call.1} parent=1 // pred_region
      _
    $region9: #{tpu_custom_call.1} parent=1 // pred_fallthru
      _
    // Predicated region
    $region10: #{tpu_custom_call.1} parent=1 // pred_check
      _
    $region11: #{tpu_custom_call.1} parent=1 // pred_check_branch
      %16 = sbr.rel (0) target = $region13
    $region12: #{tpu_custom_call.1} parent=1 // pred_region
      _
    $region13: #{tpu_custom_call.1} parent=1 // pred_fallthru
      _
    // Predicated region
    $region14: #{tpu_custom_call.1} parent=1 // pred_check
      _
    $region15: #{tpu_custom_call.1} parent=1 // pred_check_branch
      %18 = sbr.rel (0) target = $region17
    $region16: #{tpu_custom_call.1} parent=1 // pred_region
      _
    $region17: #{tpu_custom_call.1} parent=1 // pred_fallthru
      _
    // Predicated region
    $region18: #{tpu_custom_call.1} parent=1 // pred_check
      _
    $region19: #{tpu_custom_call.1} parent=1 // pred_check_branch
      %20 = sbr.rel (0) target = $region21
    $region20: #{tpu_custom_call.1} parent=1 // pred_region
      _
    $region21: #{tpu_custom_call.1} parent=1 // pred_fallthru
      _
    %p22 = scmp.eq.s32.totalorder 0, 0
    // Predicated region
    $region22: #{tpu_custom_call.1} parent=1 // pred_check
      %p23 = pneg %p22
    $region23: #{tpu_custom_call.1} parent=1 // pred_check_branch
      %25 = sbr.rel (%p23) target = $region25
    $region24: #{tpu_custom_call.1} parent=1 // pred_region
      %vm26 = vcmask 64512
      %27 = vst.msk [vmem:[#allocation2] sm:$0xff] %vm26, 0.0
    $region25: #{tpu_custom_call.1} parent=1 // pred_fallthru
      _
    %v28 = vld [vmem:[%s0] sm:$0xff]
    %v29 = vpack.c.bf16 %v28, %v28
    %v30 = vld [vmem:[%s1] sm:$0xf]
    %v31 = vld [vmem:[%s1 + $0x4] sm:$0xf]
    %v32 = vld [vmem:[%s2] sm:$0x1]
    %v34 = vlaneseq
    %v35 = vshrl.u32 %v34, 7
    %v36 = vsub.s32 0, %v35
    %v37 = vrot.slane %v32, %v36
    %v41 = vunpack.c.l.b16 %v30
    %v42 = vunpack.c.l.b16 %v31
    %v43 = vpack.c.b16 %v42, %v41
    %vm45 = vcmask 130048
    %v47 = vsel %vm45, %v29, 0
    %49 = vmatprep.subr.bf16.mxu0 0
    %50 = vmatpush1.bf16.msra.mxu0 %v43
    %51 = vmatprep.subr.bf16.mxu0 0
    %52 = vmatpush1.bf16.msra.mxu0 0
    %53 = vmatprep.subr.bf16.mxu0 0
    %54 = vmatpush1.bf16.msra.mxu0 0
    %55 = vmatprep.subr.bf16.mxu0 0
    %56 = vmatpush1.bf16.msra.mxu0 0
    %57 = vmatprep.subr.bf16.mxu0 0
    %58 = vmatpush1.bf16.msra.mxu0 0
    %59 = vmatprep.subr.bf16.mxu0 0
    %60 = vmatpush1.bf16.msra.mxu0 0
    %61 = vmatprep.subr.bf16.mxu0 0
    %62 = vmatpush1.bf16.msra.mxu0 0
    %63 = vmatprep.subr.bf16.mxu0 0
    %64 = vmatpush1.bf16.msra.mxu0 0
    %65 = vmatprep.subr.bf16.mxu0 0
    %66 = vmatpush1.bf16.msra.mxu0 0
    %67 = vmatprep.subr.bf16.mxu0 0
    %68 = vmatpush1.bf16.msra.mxu0 0
    %69 = vmatprep.subr.bf16.mxu0 0
    %70 = vmatpush1.bf16.msra.mxu0 0
    %71 = vmatprep.subr.bf16.mxu0 0
    %72 = vmatpush1.bf16.msra.mxu0 0
    %73 = vmatprep.subr.bf16.mxu0 0
    %74 = vmatpush1.bf16.msra.mxu0 0
    %75 = vmatprep.subr.bf16.mxu0 0
    %76 = vmatpush1.bf16.msra.mxu0 0
    %77 = vmatprep.subr.bf16.mxu0 0
    %78 = vmatpush1.bf16.msra.mxu0 0
    %79 = vmatprep.subr.bf16.mxu0 0
    %80 = vmatpush1.bf16.msra.mxu0 0
    %81 = vmatprep.mubr.bf16.mxu0 0
    %82 = vmatmul.mubr.bf16.gmra.mrb[0].mxu0 %v47
    %v83 = vpop.f32.mrb[0].mxu0
    %v84 = vadd.f32 %v37, %v83
    %v85 = vpop.f32.mrb[0].mxu0
    %v86 = vpop.f32.mrb[0].mxu0
    %v87 = vpop.f32.mrb[0].mxu0
    %88 = vdwg.mxu0
    %v89 = vmul.f32 %v84, 0.5
    %v90 = vtanh.pop %v89
    %v91 = vmul.f32 %v90, 0.5
    %v92 = vadd.f32 %v91, 0.5
    %v93 = vld [vmem:[#allocation2] sm:$0xff]
    %v94 = vpack.c.bf16 %v92, %v92
    %v95 = vld [vmem:[%s3] sm:$0xf]
    %v96 = vld [vmem:[%s3 + $0x4] sm:$0xf]
    %v97 = vld [vmem:[%s3 + $0x8] sm:$0xf]
    %v98 = vld [vmem:[%s3 + $0xc] sm:$0xf]
    %v103 = vunpack.c.l.b16 %v95
    %v104 = vunpack.c.l.b16 %v96
    %v105 = vunpack.c.l.b16 %v97
    %v106 = vunpack.c.l.b16 %v98
    %v107 = vpack.c.b16 %v104, %v103
    %v108 = vpack.c.b16 %v106, %v105
    %vm111 = vcmask 261120
    %v113 = vsel %vm111, %v94, 0
    %115 = vmatprep.subr.bf16.mxu0 0
    %116 = vmatpush1.bf16.msra.mxu0 %v107
    %117 = vmatprep.subr.bf16.mxu0 0
    %118 = vmatpush1.bf16.msra.mxu0 %v108
    %119 = vmatprep.subr.bf16.mxu0 0
    %120 = vmatpush1.bf16.msra.mxu0 0
    %121 = vmatprep.subr.bf16.mxu0 0
    %122 = vmatpush1.bf16.msra.mxu0 0
    %123 = vmatprep.subr.bf16.mxu0 0
    %124 = vmatpush1.bf16.msra.mxu0 0
    %125 = vmatprep.subr.bf16.mxu0 0
    %126 = vmatpush1.bf16.msra.mxu0 0
    %127 = vmatprep.subr.bf16.mxu0 0
    %128 = vmatpush1.bf16.msra.mxu0 0
    %129 = vmatprep.subr.bf16.mxu0 0
    %130 = vmatpush1.bf16.msra.mxu0 0
    %131 = vmatprep.subr.bf16.mxu0 0
    %132 = vmatpush1.bf16.msra.mxu0 0
    %133 = vmatprep.subr.bf16.mxu0 0
    %134 = vmatpush1.bf16.msra.mxu0 0
    %135 = vmatprep.subr.bf16.mxu0 0
    %136 = vmatpush1.bf16.msra.mxu0 0
    %137 = vmatprep.subr.bf16.mxu0 0
    %138 = vmatpush1.bf16.msra.mxu0 0
    %139 = vmatprep.subr.bf16.mxu0 0
    %140 = vmatpush1.bf16.msra.mxu0 0
    %141 = vmatprep.subr.bf16.mxu0 0
    %142 = vmatpush1.bf16.msra.mxu0 0
    %143 = vmatprep.subr.bf16.mxu0 0
    %144 = vmatpush1.bf16.msra.mxu0 0
    %145 = vmatprep.subr.bf16.mxu0 0
    %146 = vmatpush1.bf16.msra.mxu0 0
    %147 = vmatprep.mubr.bf16.mxu0 0
    %148 = vmatmul.mubr.bf16.gmra.mrb[0].mxu0 %v113
    %v149 = vpop.f32.mrb[0].mxu0
    %v150 = vadd.f32 0.0, %v149
    %v151 = vpop.f32.mrb[0].mxu0
    %v152 = vpop.f32.mrb[0].mxu0
    %v153 = vpop.f32.mrb[0].mxu0
    %154 = vdwg.mxu0
    %v155 = vadd.f32 %v93, %v150
    %vm156 = vcmask 64512
    %157 = vst.msk [vmem:[#allocation2] sm:$0xff] %vm156, %v155
    // Predicated region
    $region26: #{tpu_custom_call.1} parent=1 // pred_check
      %p158 = pneg %p22
    $region27: #{tpu_custom_call.1} parent=1 // pred_check_branch
      %160 = sbr.rel (%p158) target = $region29
    $region28: #{tpu_custom_call.1} parent=1 // pred_region
      %v161 = vld [vmem:[#allocation2] sm:$0xff]
      %v162 = vld [vmem:[%s4] sm:$0x1]
      %v164 = vlaneseq
      %v165 = vshrl.u32 %v164, 7
      %v166 = vsub.s32 0, %v165
      %v167 = vrot.slane %v162, %v166
      %v169 = vadd.f32 %v161, %v167
      %v170 = vmul.f32 %v169, 0.5
      %v171 = vtanh.pop %v170
      %v172 = vmul.f32 %v171, 0.5
      %v173 = vadd.f32 %v172, 0.5
      %174 = vst.msk [vmem:[#allocation3] sm:$0xff] %vm156, %v173
    $region29: #{tpu_custom_call.1} parent=1 // pred_fallthru
      _
    // Predicated region
    $region30: #{tpu_custom_call.1} parent=1 // pred_check
      _
    $region31: #{tpu_custom_call.1} parent=1 // pred_check_branch
      %176 = sbr.rel (0) target = $region33
    $region32: #{tpu_custom_call.1} parent=1 // pred_region
      %s178 = ssub.s32 128, 128
      %179 = vsyncadd [#allocation4], %s178
      %s181 = sshll.u32 [#allocation3], 4
      %s182 = int_to_ptr.vmem [resolvable:$true] %s181
      %184 = dma.vmem_to_hbm [thread:$0]  %s182, 128, %s5, [#allocation4]
    $region33: #{tpu_custom_call.1} parent=1 // pred_fallthru
      _
    // Predicated region
    $region34: #{tpu_custom_call.1} parent=1 // pred_check
      _
    $region35: #{tpu_custom_call.1} parent=1 // pred_check_branch
      %186 = sbr.rel (0) target = $region37
    $region36: #{tpu_custom_call.1} parent=1 // pred_region
      %187 = dma.done [#allocation4], 128
    $region37: #{tpu_custom_call.1} parent=1 // pred_fallthru
      _
    %188 = vsyncpa [#allocation4], 1

</llo_original>
